<compile_context>
chip_gen: v5e
topology: v5e:2x2
jax: 0.10.0
libtpu: 0.0.40
codegen_flags: <defaults>
</compile_context>

<pallas_src>
import math
import functools

import jax
import jax.numpy as jnp
from jax import lax
from jax.experimental import pallas as pl
from jax.experimental.pallas import tpu as pltpu

_NEG_INF = -1e30  # finite "-inf" so masked rows never produce NaNs


# ---------------------------------------------------------------------------
# Tile-size helpers (always legal under the (8, 128) block constraint).
# ---------------------------------------------------------------------------
def _row_tile(m, target=512):
    """Largest multiple-of-8 divisor of m not exceeding target, else full m."""
    if m <= target:
        return m
    for cand in range(target, 7, -8):
        if m % cand == 0:
            return cand
    return m


def _lane_tile(n, target=512):
    """Largest multiple-of-128 divisor of n not exceeding target, else full n."""
    if n <= target:
        return n
    for cand in range(target, 127, -128):
        if n % cand == 0:
            return cand
    return n


def _heads_per_group(n_head, head_dim):
    """Heads packed per flash-kernel lane block (lane width multiple of 128 or C)."""
    hpg = min(n_head, max(1, 128 // head_dim))
    if n_head % hpg != 0 or (hpg * head_dim) % 128 != 0:
        hpg = n_head  # lane block = full C (always a legal block shape)
    return hpg


# ---------------------------------------------------------------------------
# Fused qkv projection:  q/k/v[tm, tn] = x[tm, K] @ w*[K, tn] + b*[1, tn]
# Grid (M//tm, N//tn): rows parallel, weight panels stream along N.
# ---------------------------------------------------------------------------
def _qkv_kernel(x_ref, wq_ref, wk_ref, wv_ref, bq_ref, bk_ref, bv_ref,
                q_ref, k_ref, v_ref):
    x = x_ref[...]
    q_ref[...] = (jnp.dot(x, wq_ref[...], preferred_element_type=jnp.float32)
                  + bq_ref[...]).astype(q_ref.dtype)
    k_ref[...] = (jnp.dot(x, wk_ref[...], preferred_element_type=jnp.float32)
                  + bk_ref[...]).astype(k_ref.dtype)
    v_ref[...] = (jnp.dot(x, wv_ref[...], preferred_element_type=jnp.float32)
                  + bv_ref[...]).astype(v_ref.dtype)


def _qkv_projection(x, wq, wk, wv, bq, bk, bv):
    m, k_dim = x.shape
    n = wq.shape[1]
    tm = _row_tile(m)
    tn = _lane_tile(n)
    x_spec = pl.BlockSpec((tm, k_dim), lambda i, j: (i, 0))
    w_spec = pl.BlockSpec((k_dim, tn), lambda i, j: (0, j))
    b_spec = pl.BlockSpec((1, tn), lambda i, j: (0, j))
    o_spec = pl.BlockSpec((tm, tn), lambda i, j: (i, j))
    out_sd = jax.ShapeDtypeStruct((m, n), jnp.bfloat16)
    return pl.pallas_call(
        _qkv_kernel,
        out_shape=(out_sd, out_sd, out_sd),
        grid_spec=pltpu.PrefetchScalarGridSpec(
            num_scalar_prefetch=0,
            grid=(m // tm, n // tn),
            in_specs=[x_spec, w_spec, w_spec, w_spec, b_spec, b_spec, b_spec],
            out_specs=(o_spec, o_spec, o_spec),
        ),
        compiler_params=pltpu.CompilerParams(
            dimension_semantics=("parallel", "parallel")),
    )(x, wq, wk, wv, bq, bk, bv)


# ---------------------------------------------------------------------------
# Output projection: out[tm, tn] = x[tm, K] @ w[K, tn] + b[1, tn]
# ---------------------------------------------------------------------------
def _linear_kernel(x_ref, w_ref, b_ref, o_ref):
    acc = jnp.dot(x_ref[...], w_ref[...], preferred_element_type=jnp.float32)
    o_ref[...] = (acc + b_ref[...]).astype(o_ref.dtype)


def _linear(x, w, b, out_dtype):
    m, k_dim = x.shape
    n = w.shape[1]
    tm = _row_tile(m)
    tn = _lane_tile(n)
    return pl.pallas_call(
        _linear_kernel,
        out_shape=jax.ShapeDtypeStruct((m, n), out_dtype),
        grid_spec=pltpu.PrefetchScalarGridSpec(
            num_scalar_prefetch=0,
            grid=(m // tm, n // tn),
            in_specs=[pl.BlockSpec((tm, k_dim), lambda i, j: (i, 0)),
                      pl.BlockSpec((k_dim, tn), lambda i, j: (0, j)),
                      pl.BlockSpec((1, tn), lambda i, j: (0, j))],
            out_specs=pl.BlockSpec((tm, tn), lambda i, j: (i, j)),
        ),
        compiler_params=pltpu.CompilerParams(
            dimension_semantics=("parallel", "parallel")),
    )(x, w, b)


# ---------------------------------------------------------------------------
# Flash-style causal attention with online softmax, head-grouped lane blocks.
# q/k/v/y all live in (B, T, C) layout (C = n_head * D, head-major lanes).
# Grid: (B, head_groups, T//tq, T//tkv); KV axis is the sequential reduction.
# ---------------------------------------------------------------------------
def _flash_attn_kernel(q_ref, k_ref, v_ref, o_ref, m_sc, l_sc, acc_sc,
                       *, tq, tkv, head_dim, hpg):
    qi = pl.program_id(2)
    ki = pl.program_id(3)
    D = head_dim

    @pl.when(ki == 0)
    def _init():
        m_sc[...] = jnp.full(m_sc.shape, _NEG_INF, dtype=m_sc.dtype)
        l_sc[...] = jnp.zeros(l_sc.shape, dtype=l_sc.dtype)
        acc_sc[...] = jnp.zeros(acc_sc.shape, dtype=acc_sc.dtype)

    def _attend(masked):
        q = q_ref[0]            # (tq,  hpg*D) bf16; 1/sqrt(D) folded into W_q
        k = k_ref[0]            # (tkv, hpg*D) bf16
        v = v_ref[0]            # (tkv, hpg*D) bf16
        if masked:
            # qi/ki-independent iota diff; single scalar compare per tile.
            diff = (lax.broadcasted_iota(jnp.int32, (tq, tkv), 1) -
                    lax.broadcasted_iota(jnp.int32, (tq, tkv), 0))
            ok = diff <= (qi * tq - ki * tkv)
        for h in range(hpg):
            lo = h * D
            # Contract D on both sides — no explicit K transpose (XLU stays free).
            s = lax.dot_general(q[:, lo:lo + D], k[:, lo:lo + D],
                                (((1,), (1,)), ((), ())),
                                preferred_element_type=jnp.float32)  # (tq, tkv)
            if masked:
                s = jnp.where(ok, s, _NEG_INF)
            m_prev = m_sc[h]                                         # (tq, 1)
            m_new = jnp.maximum(m_prev, jnp.max(s, axis=-1, keepdims=True))
            alpha = jnp.exp(m_prev - m_new)
            p = jnp.exp(s - m_new)                                   # f32
            l_sc[h] = alpha * l_sc[h] + jnp.sum(p, axis=-1, keepdims=True)
            pv = lax.dot_general(p.astype(v.dtype), v[:, lo:lo + D],
                                 (((1,), (0,)), ((), ())),
                                 preferred_element_type=jnp.float32)  # (tq, D)
            acc_sc[:, lo:lo + D] = alpha * acc_sc[:, lo:lo + D] + pv
            m_sc[h] = m_new

    # Diagonal tiles need the causal mask; fully-below-diagonal tiles skip it;
    # fully-above-diagonal tiles skip all compute (and their K/V DMA is clamped
    # away in the index_map so no copies are issued).
    on_diag = jnp.logical_and(ki * tkv <= qi * tq + (tq - 1),
                              ki * tkv + (tkv - 1) > qi * tq)
    below_diag = ki * tkv + (tkv - 1) <= qi * tq

    @pl.when(on_diag)
    def _masked():
        _attend(masked=True)

    @pl.when(below_diag)
    def _unmasked():
        _attend(masked=False)

    @pl.when(ki == pl.num_programs(3) - 1)
    def _finalize():
        for h in range(hpg):
            lo = h * D
            inv = pl.reciprocal(l_sc[h], approx=True)                # EUP slot
            acc_sc[:, lo:lo + D] = acc_sc[:, lo:lo + D] * inv
        o_ref[0] = acc_sc[...].astype(o_ref.dtype)                   # dense store


def _flash_attention(q, k, v, *, n_head):
    B, T, C = q.shape
    D = C // n_head
    hpg = _heads_per_group(n_head, D)
    W = hpg * D
    HG = n_head // hpg
    tq = _row_tile(T, target=512)
    tkv = tq

    kernel = functools.partial(_flash_attn_kernel, tq=tq, tkv=tkv,
                               head_dim=D, hpg=hpg)

    def q_map(b, g, qi, ki):
        return (b, qi, g)

    def kv_map(b, g, qi, ki):
        # Clamp above-diagonal KV tiles to the last needed block so skipped
        # tiles reuse the resident buffer instead of issuing a fresh DMA.
        return (b, jnp.minimum(ki, (qi * tq + tq - 1) // tkv), g)

    return pl.pallas_call(
        kernel,
        out_shape=jax.ShapeDtypeStruct((B, T, C), q.dtype),
        grid_spec=pltpu.PrefetchScalarGridSpec(
            num_scalar_prefetch=0,
            grid=(B, HG, T // tq, T // tkv),
            in_specs=[pl.BlockSpec((1, tq, W), q_map),
                      pl.BlockSpec((1, tkv, W), kv_map),
                      pl.BlockSpec((1, tkv, W), kv_map)],
            out_specs=pl.BlockSpec((1, tq, W), q_map),
            scratch_shapes=[
                pltpu.VMEM((hpg, tq, 1), jnp.float32),   # running max  m
                pltpu.VMEM((hpg, tq, 1), jnp.float32),   # running sum  l
                pltpu.VMEM((tq, W), jnp.float32),        # output accumulator
            ],
        ),
        compiler_params=pltpu.CompilerParams(
            dimension_semantics=("parallel", "parallel", "parallel", "arbitrary")),
    )(q, k, v)


# ---------------------------------------------------------------------------
# Full forward pass: fused qkv projection -> flash attention -> output proj.
# ---------------------------------------------------------------------------
def causal_self_attention(x, w_attn, b_attn, w_proj, b_proj, *, n_head):
    B, T, C = x.shape
    assert C % n_head == 0
    D = C // n_head
    scale = 1.0 / math.sqrt(D)

    # Split the fused qkv weight; fold 1/sqrt(D) into the Q projection in f32
    # (zero runtime cost, slightly better accuracy than a bf16 q*scale).
    wq = (w_attn[:, :C] * scale).astype(jnp.bfloat16)
    wk = w_attn[:, C:2 * C].astype(jnp.bfloat16)
    wv = w_attn[:, 2 * C:].astype(jnp.bfloat16)
    bq = (b_attn[:, :C] * scale).astype(jnp.float32)
    bk = b_attn[:, C:2 * C].astype(jnp.float32)
    bv = b_attn[:, 2 * C:].astype(jnp.float32)
    w_proj_bf = w_proj.astype(jnp.bfloat16)
    b_proj_f32 = b_proj.astype(jnp.float32)

    x_bf = x.astype(jnp.bfloat16).reshape(B * T, C)

    # 1) fused qkv projection (x read once, weights stream as N panels)
    q, k, v = _qkv_projection(x_bf, wq, wk, wv, bq, bk, bv)   # each (B*T, C) bf16

    # Free reshapes only — no transposes, no extra HBM round-trips.
    q = q.reshape(B, T, C)
    k = k.reshape(B, T, C)
    v = v.reshape(B, T, C)

    # 2) flash-style causal attention; output already in (B, T, C) layout
    y = _flash_attention(q, k, v, n_head=n_head)              # (B, T, C) bf16

    # 3) output projection
    out = _linear(y.reshape(B * T, C), w_proj_bf, b_proj_f32, out_dtype=x.dtype)
    return out.reshape(B, T, C)


# ---------------------------------------------------------------------------
# Pure-JAX reference reproducing the PyTorch forward (dropout = 0, f32).
# ---------------------------------------------------------------------------
def _reference(x, w_attn, b_attn, w_proj, b_proj, n_head):
    B, T, C = x.shape
    D = C // n_head
    qkv = x @ w_attn + b_attn                                 # (B, T, 3C)
    q, k, v = jnp.split(qkv, 3, axis=-1)
    q = q.reshape(B, T, n_head, D).transpose(0, 2, 1, 3)      # (B, H, T, D)
    k = k.reshape(B, T, n_head, D).transpose(0, 2, 1, 3)
    v = v.reshape(B, T, n_head, D).transpose(0, 2, 1, 3)
    att = jnp.einsum('bhtd,bhsd->bhts', q, k) / math.sqrt(D)
    mask = jnp.tril(jnp.ones((T, T), dtype=bool))
    att = jnp.where(mask[None, None], att, -jnp.inf)
    att = jax.nn.softmax(att, axis=-1)
    y = jnp.einsum('bhts,bhsd->bhtd', att, v)
    y = y.transpose(0, 2, 1, 3).reshape(B, T, C)
    return y @ w_proj + b_proj


if __name__ == "__main__":
    # Small config consistent with the module: B=2, block_size(T)=8, n_embd=32, n_head=4
    B, T, C, n_head = 2, 8, 32, 4
    key = jax.random.PRNGKey(0)
    kx, kwa, kba, kwp, kbp = jax.random.split(key, 5)

    x = jax.random.normal(kx, (B, T, C), dtype=jnp.float32)
    # Deterministic parameter init (Linear-like scale); stored pre-transposed for x @ W.
    w_attn = jax.random.normal(kwa, (C, 3 * C), dtype=jnp.float32) * (1.0 / math.sqrt(C))
    b_attn = jax.random.normal(kba, (1, 3 * C), dtype=jnp.float32) * 0.02
    w_proj = jax.random.normal(kwp, (C, C), dtype=jnp.float32) * (1.0 / math.sqrt(C))
    b_proj = jax.random.normal(kbp, (1, C), dtype=jnp.float32) * 0.02

    y = causal_self_attention(x, w_attn, b_attn, w_proj, b_proj, n_head=n_head)
    y = jax.block_until_ready(y)

    y_ref = _reference(x, w_attn, b_attn, w_proj, b_proj, n_head)
    assert y.shape == (B, T, C)
    # bf16 MXU operands + approximate reciprocal => looser tolerance than pure f32.
    assert jnp.allclose(y, y_ref, atol=5e-2, rtol=5e-2), "mismatch vs reference"

    print("KERNEL_OK")
</pallas_src>

<mosaic_0001>
module attributes {stable_mosaic.version = 11 : i64} {
  func.func @_qkv_kernel(%arg0: i32, %arg1: i32, %arg2: memref<16x32xbf16, #tpu.memory_space<vmem>>, %arg3: memref<32x32xbf16, #tpu.memory_space<vmem>>, %arg4: memref<32x32xbf16, #tpu.memory_space<vmem>>, %arg5: memref<32x32xbf16, #tpu.memory_space<vmem>>, %arg6: memref<1x32xf32, #tpu.memory_space<vmem>>, %arg7: memref<1x32xf32, #tpu.memory_space<vmem>>, %arg8: memref<1x32xf32, #tpu.memory_space<vmem>>, %arg9: memref<16x32xbf16, #tpu.memory_space<vmem>>, %arg10: memref<16x32xbf16, #tpu.memory_space<vmem>>, %arg11: memref<16x32xbf16, #tpu.memory_space<vmem>>) attributes {dimension_semantics = [#tpu.dimension_semantics<parallel>, #tpu.dimension_semantics<parallel>], iteration_bounds = array<i64: 1, 1>, scalar_prefetch = 0 : i64, scratch_operands = 0 : i64, tpu.core_type = #tpu.core_type<tc>, window_params = [{transform_indices = @transform_0, window_bounds = array<i64: 16, 32>}, {transform_indices = @transform_1, window_bounds = array<i64: 32, 32>}, {transform_indices = @transform_2, window_bounds = array<i64: 32, 32>}, {transform_indices = @transform_3, window_bounds = array<i64: 32, 32>}, {transform_indices = @transform_4, window_bounds = array<i64: 1, 32>}, {transform_indices = @transform_5, window_bounds = array<i64: 1, 32>}, {transform_indices = @transform_6, window_bounds = array<i64: 1, 32>}, {transform_indices = @transform_7, window_bounds = array<i64: 16, 32>}, {transform_indices = @transform_8, window_bounds = array<i64: 16, 32>}, {transform_indices = @transform_9, window_bounds = array<i64: 16, 32>}]} {
    %c0 = arith.constant 0 : index
    %c0_0 = arith.constant 0 : index
    %0 = vector.load %arg2[%c0, %c0_0] : memref<16x32xbf16, #tpu.memory_space<vmem>>, vector<16x32xbf16>
    %c0_1 = arith.constant 0 : index
    %c0_2 = arith.constant 0 : index
    %1 = vector.load %arg3[%c0_1, %c0_2] : memref<32x32xbf16, #tpu.memory_space<vmem>>, vector<32x32xbf16>
    %cst = arith.constant dense<0.000000e+00> : vector<16x32xf32>
    %2 = tpu.matmul %0, %1, %cst {dimension_numbers = #tpu.dot_dimension_numbers<[1], [0], [0], [1], [0, 0, 1, 1], [], []>} : vector<16x32xbf16>, vector<32x32xbf16>, vector<16x32xf32> -> vector<16x32xf32>
    %c0_3 = arith.constant 0 : index
    %c0_4 = arith.constant 0 : index
    %3 = vector.load %arg6[%c0_3, %c0_4] : memref<1x32xf32, #tpu.memory_space<vmem>>, vector<1x32xf32>
    %4 = vector.broadcast %3 : vector<1x32xf32> to vector<16x32xf32>
    %5 = arith.addf %2, %4 : vector<16x32xf32>
    %6 = arith.truncf %5 : vector<16x32xf32> to vector<16x32xbf16>
    %c0_5 = arith.constant 0 : index
    %c0_6 = arith.constant 0 : index
    %7 = vector.load %arg9[%c0_5, %c0_6] : memref<16x32xbf16, #tpu.memory_space<vmem>>, vector<16x32xbf16>
    tpu.vector_store %arg9[%c0_5, %c0_6], %6 {strides = array<i32>} : memref<16x32xbf16, #tpu.memory_space<vmem>>, vector<16x32xbf16>,
    %c0_7 = arith.constant 0 : index
    %c0_8 = arith.constant 0 : index
    %8 = vector.load %arg4[%c0_7, %c0_8] : memref<32x32xbf16, #tpu.memory_space<vmem>>, vector<32x32xbf16>
    %cst_9 = arith.constant dense<0.000000e+00> : vector<16x32xf32>
    %9 = tpu.matmul %0, %8, %cst_9 {dimension_numbers = #tpu.dot_dimension_numbers<[1], [0], [0], [1], [0, 0, 1, 1], [], []>} : vector<16x32xbf16>, vector<32x32xbf16>, vector<16x32xf32> -> vector<16x32xf32>
    %c0_10 = arith.constant 0 : index
    %c0_11 = arith.constant 0 : index
    %10 = vector.load %arg7[%c0_10, %c0_11] : memref<1x32xf32, #tpu.memory_space<vmem>>, vector<1x32xf32>
    %11 = vector.broadcast %10 : vector<1x32xf32> to vector<16x32xf32>
    %12 = arith.addf %9, %11 : vector<16x32xf32>
    %13 = arith.truncf %12 : vector<16x32xf32> to vector<16x32xbf16>
    %c0_12 = arith.constant 0 : index
    %c0_13 = arith.constant 0 : index
    %14 = vector.load %arg10[%c0_12, %c0_13] : memref<16x32xbf16, #tpu.memory_space<vmem>>, vector<16x32xbf16>
    tpu.vector_store %arg10[%c0_12, %c0_13], %13 {strides = array<i32>} : memref<16x32xbf16, #tpu.memory_space<vmem>>, vector<16x32xbf16>,
    %c0_14 = arith.constant 0 : index
    %c0_15 = arith.constant 0 : index
    %15 = vector.load %arg5[%c0_14, %c0_15] : memref<32x32xbf16, #tpu.memory_space<vmem>>, vector<32x32xbf16>
    %cst_16 = arith.constant dense<0.000000e+00> : vector<16x32xf32>
    %16 = tpu.matmul %0, %15, %cst_16 {dimension_numbers = #tpu.dot_dimension_numbers<[1], [0], [0], [1], [0, 0, 1, 1], [], []>} : vector<16x32xbf16>, vector<32x32xbf16>, vector<16x32xf32> -> vector<16x32xf32>
    %c0_17 = arith.constant 0 : index
    %c0_18 = arith.constant 0 : index
    %17 = vector.load %arg8[%c0_17, %c0_18] : memref<1x32xf32, #tpu.memory_space<vmem>>, vector<1x32xf32>
    %18 = vector.broadcast %17 : vector<1x32xf32> to vector<16x32xf32>
    %19 = arith.addf %16, %18 : vector<16x32xf32>
    %20 = arith.truncf %19 : vector<16x32xf32> to vector<16x32xbf16>
    %c0_19 = arith.constant 0 : index
    %c0_20 = arith.constant 0 : index
    %21 = vector.load %arg11[%c0_19, %c0_20] : memref<16x32xbf16, #tpu.memory_space<vmem>>, vector<16x32xbf16>
    tpu.vector_store %arg11[%c0_19, %c0_20], %20 {strides = array<i32>} : memref<16x32xbf16, #tpu.memory_space<vmem>>, vector<16x32xbf16>,
    return
  }
  func.func @transform_0(%arg0: i32, %arg1: i32) -> (i32, i32) {
    %c0_i32 = arith.constant 0 : i32
    %c0_i32_0 = arith.constant 0 : i32
    return %arg0, %c0_i32 : i32, i32
  }
  func.func @transform_1(%arg0: i32, %arg1: i32) -> (i32, i32) {
    %c0_i32 = arith.constant 0 : i32
    %c0_i32_0 = arith.constant 0 : i32
    return %c0_i32, %arg1 : i32, i32
  }
  func.func @transform_2(%arg0: i32, %arg1: i32) -> (i32, i32) {
    %c0_i32 = arith.constant 0 : i32
    %c0_i32_0 = arith.constant 0 : i32
    return %c0_i32, %arg1 : i32, i32
  }
  func.func @transform_3(%arg0: i32, %arg1: i32) -> (i32, i32) {
    %c0_i32 = arith.constant 0 : i32
    %c0_i32_0 = arith.constant 0 : i32
    return %c0_i32, %arg1 : i32, i32
  }
  func.func @transform_4(%arg0: i32, %arg1: i32) -> (i32, i32) {
    %c0_i32 = arith.constant 0 : i32
    %c0_i32_0 = arith.constant 0 : i32
    return %c0_i32, %arg1 : i32, i32
  }
  func.func @transform_5(%arg0: i32, %arg1: i32) -> (i32, i32) {
    %c0_i32 = arith.constant 0 : i32
    %c0_i32_0 = arith.constant 0 : i32
    return %c0_i32, %arg1 : i32, i32
  }
  func.func @transform_6(%arg0: i32, %arg1: i32) -> (i32, i32) {
    %c0_i32 = arith.constant 0 : i32
    %c0_i32_0 = arith.constant 0 : i32
    return %c0_i32, %arg1 : i32, i32
  }
  func.func @transform_7(%arg0: i32, %arg1: i32) -> (i32, i32) {
    %c0_i32 = arith.constant 0 : i32
    return %arg0, %arg1 : i32, i32
  }
  func.func @transform_8(%arg0: i32, %arg1: i32) -> (i32, i32) {
    %c0_i32 = arith.constant 0 : i32
    return %arg0, %arg1 : i32, i32
  }
  func.func @transform_9(%arg0: i32, %arg1: i32) -> (i32, i32) {
    %c0_i32 = arith.constant 0 : i32
    return %arg0, %arg1 : i32, i32
  }
}

</mosaic_0001>

<llo_original>
// kernel: tpu_custom_call.1
$region0: #{tpu_custom_call.1}
  #allocation0 [shape = 'u32[]', space=smem, size = 0x4, offset = 0x4, fixed_abs, tag = 'smem constant byte address 0x4 - core index']
  #allocation1 [shape = 'u32[72,128]{1,0:T(1,128)}', space=vmem, size = 0x9000, scoped, tag = 'internal scratch']
  %s0 = inlined_call_operand.hbm [shape: bf16[16,32], index: 0, kind: input, shape index: {}]
  %s1 = inlined_call_operand.hbm [shape: bf16[32,32], index: 1, kind: input, shape index: {}]
  %s2 = inlined_call_operand.hbm [shape: bf16[32,32], index: 2, kind: input, shape index: {}]
  %s3 = inlined_call_operand.hbm [shape: bf16[32,32], index: 3, kind: input, shape index: {}]
  %s4 = inlined_call_operand.vmem [shape: f32[1,32], index: 4, kind: input, shape index: {}]
  %s5 = inlined_call_operand.vmem [shape: f32[1,32], index: 5, kind: input, shape index: {}]
  %s6 = inlined_call_operand.vmem [shape: f32[1,32], index: 6, kind: input, shape index: {}]
  %s7 = inlined_call_operand.hbm [shape: bf16[16,32], index: 7, kind: output, shape index: {0}]
  %s8 = inlined_call_operand.hbm [shape: bf16[16,32], index: 8, kind: output, shape index: {1}]
  %s9 = inlined_call_operand.hbm [shape: bf16[16,32], index: 9, kind: output, shape index: {2}]
  %10 = xla_tuple %s7, %s8, %s9
  %s11 = sld [smem:[#allocation0]]
  $region70: #{tpu_custom_call.1} parent=0
    _
  %s13 = ssub.s32 1, %s11
  %s14 = scalar_select 0, %s13, %s11
  $region1: #{tpu_custom_call.1} parent=0
    #allocation2 [shape = 'u8[4096]{0}', space=vmem, size = 0x1000, scoped, tag = 'input window, operand 0, single buffered']
    #allocation3 [shape = 's32[1]{0}', space=sflag, size = 0x4, scoped, tag = 'scoped memory for tpu_custom_call.1']
    #allocation4 [shape = 's32[1]{0}', space=sflag, size = 0x4, scoped, tag = 'scoped memory for tpu_custom_call.1']
    #allocation5 [shape = 'u8[8192]{0}', space=vmem, size = 0x2000, scoped, tag = 'input window, operand 1, single buffered']
    #allocation6 [shape = 's32[1]{0}', space=sflag, size = 0x4, scoped, tag = 'scoped memory for tpu_custom_call.1']
    #allocation7 [shape = 'u8[8192]{0}', space=vmem, size = 0x2000, scoped, tag = 'input window, operand 2, single buffered']
    #allocation8 [shape = 'u8[8192]{0}', space=vmem, size = 0x2000, scoped, tag = 'input window, operand 3, single buffered']
    #allocation9 [shape = 's32[1]{0}', space=sflag, size = 0x4, scoped, tag = 'scoped memory for tpu_custom_call.1']
    #allocation10 [shape = 'u8[4096]{0}', space=vmem, size = 0x1000, scoped, tag = 'output window, operand 0, single buffered']
    #allocation11 [shape = 'u8[4096]{0}', space=vmem, size = 0x1000, scoped, tag = 'output window, operand 1, single buffered']
    #allocation12 [shape = 's32[1]{0}', space=sflag, size = 0x4, scoped, tag = 'scoped memory for tpu_custom_call.1']
    #allocation13 [shape = 'u8[4096]{0}', space=vmem, size = 0x1000, scoped, tag = 'output window, operand 2, single buffered']
    %15 = vsyncpa [#allocation3], 0
    %16 = vsyncpa [#allocation6], 0
    %17 = vsyncpa [#allocation9], 0
    %18 = vsyncpa [#allocation4], 0
    %19 = vsyncpa [#allocation12], 0
    // Predicated region
    $region2: #{tpu_custom_call.1} parent=1 // pred_check
      _
    $region3: #{tpu_custom_call.1} parent=1 // pred_check_branch
      %21 = sbr.rel (0) target = $region5
    $region4: #{tpu_custom_call.1} parent=1 // pred_region
      %23 = vsyncadd [#allocation3], 0
      %s24 = sshll.u32 %s0, 4
      %s25 = int_to_ptr.hbm [resolvable:$true] %s24
      %s26 = sshll.u32 [#allocation2], 4
      %s27 = int_to_ptr.vmem [resolvable:$true] %s26
      %32 = dma.hbm_to_vmem [thread:$0]  %s25, 128, %s27, [#allocation3], 64, 64, 4
    $region5: #{tpu_custom_call.1} parent=1 // pred_fallthru
      _
    // Predicated region
    $region6: #{tpu_custom_call.1} parent=1 // pred_check
      _
    $region7: #{tpu_custom_call.1} parent=1 // pred_check_branch
      %34 = sbr.rel (0) target = $region9
    $region8: #{tpu_custom_call.1} parent=1 // pred_region
      %36 = vsyncadd [#allocation6], 0
      %s37 = sshll.u32 %s1, 4
      %s38 = int_to_ptr.hbm [resolvable:$true] %s37
      %s39 = sshll.u32 [#allocation5], 4
      %s40 = int_to_ptr.vmem [resolvable:$true] %s39
      %45 = dma.hbm_to_vmem [thread:$0]  %s38, 256, %s40, [#allocation6], 64, 64, 4
    $region9: #{tpu_custom_call.1} parent=1 // pred_fallthru
      _
    // Predicated region
    $region10: #{tpu_custom_call.1} parent=1 // pred_check
      _
    $region11: #{tpu_custom_call.1} parent=1 // pred_check_branch
      %47 = sbr.rel (0) target = $region13
    $region12: #{tpu_custom_call.1} parent=1 // pred_region
      %49 = vsyncadd [#allocation6], 0
      %s50 = sshll.u32 %s2, 4
      %s51 = int_to_ptr.hbm [resolvable:$true] %s50
      %s52 = sshll.u32 [#allocation7], 4
      %s53 = int_to_ptr.vmem [resolvable:$true] %s52
      %58 = dma.hbm_to_vmem [thread:$0]  %s51, 256, %s53, [#allocation6], 64, 64, 4
    $region13: #{tpu_custom_call.1} parent=1 // pred_fallthru
      _
    // Predicated region
    $region14: #{tpu_custom_call.1} parent=1 // pred_check
      _
    $region15: #{tpu_custom_call.1} parent=1 // pred_check_branch
      %60 = sbr.rel (0) target = $region17
    $region16: #{tpu_custom_call.1} parent=1 // pred_region
      %62 = vsyncadd [#allocation9], 0
      %s63 = sshll.u32 %s3, 4
      %s64 = int_to_ptr.hbm [resolvable:$true] %s63
      %s65 = sshll.u32 [#allocation8], 4
      %s66 = int_to_ptr.vmem [resolvable:$true] %s65
      %71 = dma.hbm_to_vmem [thread:$0]  %s64, 256, %s66, [#allocation9], 64, 64, 4
    $region17: #{tpu_custom_call.1} parent=1 // pred_fallthru
      _
    // Predicated region
    $region18: #{tpu_custom_call.1} parent=1 // pred_check
      _
    $region19: #{tpu_custom_call.1} parent=1 // pred_check_branch
      %73 = sbr.rel (0) target = $region21
    $region20: #{tpu_custom_call.1} parent=1 // pred_region
      _
    $region21: #{tpu_custom_call.1} parent=1 // pred_fallthru
      _
    // Predicated region
    $region22: #{tpu_custom_call.1} parent=1 // pred_check
      _
    $region23: #{tpu_custom_call.1} parent=1 // pred_check_branch
      %75 = sbr.rel (0) target = $region25
    $region24: #{tpu_custom_call.1} parent=1 // pred_region
      _
    $region25: #{tpu_custom_call.1} parent=1 // pred_fallthru
      _
    // Predicated region
    $region26: #{tpu_custom_call.1} parent=1 // pred_check
      _
    $region27: #{tpu_custom_call.1} parent=1 // pred_check_branch
      %77 = sbr.rel (0) target = $region29
    $region28: #{tpu_custom_call.1} parent=1 // pred_region
      _
    $region29: #{tpu_custom_call.1} parent=1 // pred_fallthru
      _
    // Predicated region
    $region30: #{tpu_custom_call.1} parent=1 // pred_check
      _
    $region31: #{tpu_custom_call.1} parent=1 // pred_check_branch
      %79 = sbr.rel (0) target = $region33
    $region32: #{tpu_custom_call.1} parent=1 // pred_region
      %81 = dma.done [#allocation3], 128
    $region33: #{tpu_custom_call.1} parent=1 // pred_fallthru
      _
    // Predicated region
    $region34: #{tpu_custom_call.1} parent=1 // pred_check
      _
    $region35: #{tpu_custom_call.1} parent=1 // pred_check_branch
      %83 = sbr.rel (0) target = $region37
    $region36: #{tpu_custom_call.1} parent=1 // pred_region
      %85 = dma.done [#allocation6], 256
    $region37: #{tpu_custom_call.1} parent=1 // pred_fallthru
      _
    // Predicated region
    $region38: #{tpu_custom_call.1} parent=1 // pred_check
      _
    $region39: #{tpu_custom_call.1} parent=1 // pred_check_branch
      %87 = sbr.rel (0) target = $region41
    $region40: #{tpu_custom_call.1} parent=1 // pred_region
      %89 = dma.done [#allocation6], 256
    $region41: #{tpu_custom_call.1} parent=1 // pred_fallthru
      _
    // Predicated region
    $region42: #{tpu_custom_call.1} parent=1 // pred_check
      _
    $region43: #{tpu_custom_call.1} parent=1 // pred_check_branch
      %91 = sbr.rel (0) target = $region45
    $region44: #{tpu_custom_call.1} parent=1 // pred_region
      %93 = dma.done [#allocation9], 256
    $region45: #{tpu_custom_call.1} parent=1 // pred_fallthru
      _
    %v95 = vld [vmem:[#allocation2] sm:$0xf]
    %v96 = vld [vmem:[#allocation2 + $0x4] sm:$0xf]
    %v97 = vld [vmem:[#allocation5] sm:$0xf]
    %v98 = vld [vmem:[#allocation5 + $0x4] sm:$0xf]
    %v99 = vld [vmem:[#allocation5 + $0x8] sm:$0xf]
    %v100 = vld [vmem:[#allocation5 + $0xc] sm:$0xf]
    %v101 = vld [vmem:[%s4] sm:$0x1]
    %v103 = vperm.slane %v101, 0
    %v107 = vunpack.c.l.b16 %v95
    %v108 = vunpack.c.l.b16 %v96
    %v109 = vpack.c.b16 %v108, %v107
    %v114 = vunpack.c.l.b16 %v97
    %v115 = vunpack.c.l.b16 %v98
    %v116 = vunpack.c.l.b16 %v99
    %v117 = vunpack.c.l.b16 %v100
    %v118 = vpack.c.b16 %v115, %v114
    %v119 = vpack.c.b16 %v117, %v116
    %vm122 = vcmask 261120
    %v124 = vsel %vm122, %v109, 0
    %126 = vmatpush.bf16.msra.mxu0 0
    %127 = vmatpush.bf16.msra.mxu0 0
    %128 = vmatpush.bf16.msra.mxu0 0
    %129 = vmatpush.bf16.msra.mxu0 0
    %130 = vmatpush.bf16.msra.mxu0 0
    %131 = vmatpush.bf16.msra.mxu0 0
    %132 = vmatpush.bf16.msra.mxu0 %v119
    %133 = vmatpush.bf16.msra.mxu0 %v118
    %134 = vmatmul.bf16.gmra.mxu0 %v124
    %v135 = vpop.f32.mrf.mxu0
    %v136 = vadd.f32 %v103, %v135
    %v137 = vpop.f32.mrf.mxu0
    %v138 = vadd.f32 %v103, %v137
    %139 = vdwg.mxu0
    %v140 = vpack.c.bf16 %v136, %v136
    %v141 = vpack.c.bf16 %v138, %v138
    %vm142 = vcmask 257024
    %143 = vst.msk [vmem:[#allocation10] sm:$0xf] %vm142, %v140
    %144 = vst.msk [vmem:[#allocation10 + $0x4] sm:$0xf] %vm142, %v141
    %v145 = vld [vmem:[#allocation7] sm:$0xf]
    %v146 = vld [vmem:[#allocation7 + $0x4] sm:$0xf]
    %v147 = vld [vmem:[#allocation7 + $0x8] sm:$0xf]
    %v148 = vld [vmem:[#allocation7 + $0xc] sm:$0xf]
    %v149 = vld [vmem:[%s5] sm:$0x1]
    %v151 = vperm.slane %v149, 0
    %v157 = vunpack.c.l.b16 %v145
    %v158 = vunpack.c.l.b16 %v146
    %v159 = vunpack.c.l.b16 %v147
    %v160 = vunpack.c.l.b16 %v148
    %v161 = vpack.c.b16 %v158, %v157
    %v162 = vpack.c.b16 %v160, %v159
    %165 = vmatpush.bf16.msra.mxu0 0
    %166 = vmatpush.bf16.msra.mxu0 0
    %167 = vmatpush.bf16.msra.mxu0 0
    %168 = vmatpush.bf16.msra.mxu0 0
    %169 = vmatpush.bf16.msra.mxu0 0
    %170 = vmatpush.bf16.msra.mxu0 0
    %171 = vmatpush.bf16.msra.mxu0 %v162
    %172 = vmatpush.bf16.msra.mxu0 %v161
    %173 = vmatmul.bf16.gmra.mxu0 %v124
    %v174 = vpop.f32.mrf.mxu0
    %v175 = vadd.f32 %v151, %v174
    %v176 = vpop.f32.mrf.mxu0
    %v177 = vadd.f32 %v151, %v176
    %178 = vdwg.mxu0
    %v179 = vpack.c.bf16 %v175, %v175
    %v180 = vpack.c.bf16 %v177, %v177
    %181 = vst.msk [vmem:[#allocation11] sm:$0xf] %vm142, %v179
    %182 = vst.msk [vmem:[#allocation11 + $0x4] sm:$0xf] %vm142, %v180
    %v183 = vld [vmem:[#allocation8] sm:$0xf]
    %v184 = vld [vmem:[#allocation8 + $0x4] sm:$0xf]
    %v185 = vld [vmem:[#allocation8 + $0x8] sm:$0xf]
    %v186 = vld [vmem:[#allocation8 + $0xc] sm:$0xf]
    %v187 = vld [vmem:[%s6] sm:$0x1]
    %v189 = vperm.slane %v187, 0
    %v195 = vunpack.c.l.b16 %v183
    %v196 = vunpack.c.l.b16 %v184
    %v197 = vunpack.c.l.b16 %v185
    %v198 = vunpack.c.l.b16 %v186
    %v199 = vpack.c.b16 %v196, %v195
    %v200 = vpack.c.b16 %v198, %v197
    %203 = vmatpush.bf16.msra.mxu0 0
    %204 = vmatpush.bf16.msra.mxu0 0
    %205 = vmatpush.bf16.msra.mxu0 0
    %206 = vmatpush.bf16.msra.mxu0 0
    %207 = vmatpush.bf16.msra.mxu0 0
    %208 = vmatpush.bf16.msra.mxu0 0
    %209 = vmatpush.bf16.msra.mxu0 %v200
    %210 = vmatpush.bf16.msra.mxu0 %v199
    %211 = vmatmul.bf16.gmra.mxu0 %v124
    %v212 = vpop.f32.mrf.mxu0
    %v213 = vadd.f32 %v189, %v212
    %v214 = vpop.f32.mrf.mxu0
    %v215 = vadd.f32 %v189, %v214
    %216 = vdwg.mxu0
    %v217 = vpack.c.bf16 %v213, %v213
    %v218 = vpack.c.bf16 %v215, %v215
    %219 = vst.msk [vmem:[#allocation13] sm:$0xf] %vm142, %v217
    %220 = vst.msk [vmem:[#allocation13 + $0x4] sm:$0xf] %vm142, %v218
    // Predicated region
    $region46: #{tpu_custom_call.1} parent=1 // pred_check
      _
    $region47: #{tpu_custom_call.1} parent=1 // pred_check_branch
      %222 = sbr.rel (0) target = $region49
    $region48: #{tpu_custom_call.1} parent=1 // pred_region
      %224 = vsyncadd [#allocation4], 0
      %s225 = sshll.u32 [#allocation10], 4
      %s226 = int_to_ptr.vmem [resolvable:$true] %s225
      %s227 = sshll.u32 %s7, 4
      %s228 = int_to_ptr.hbm [resolvable:$true] %s227
      %233 = dma.vmem_to_hbm [thread:$0]  %s226, 128, %s228, [#allocation4], 64, 64, 4
    $region49: #{tpu_custom_call.1} parent=1 // pred_fallthru
      _
    // Predicated region
    $region50: #{tpu_custom_call.1} parent=1 // pred_check
      _
    $region51: #{tpu_custom_call.1} parent=1 // pred_check_branch
      %235 = sbr.rel (0) target = $region53
    $region52: #{tpu_custom_call.1} parent=1 // pred_region
      %237 = vsyncadd [#allocation12], 0
      %s238 = sshll.u32 [#allocation11], 4
      %s239 = int_to_ptr.vmem [resolvable:$true] %s238
      %s240 = sshll.u32 %s8, 4
      %s241 = int_to_ptr.hbm [resolvable:$true] %s240
      %246 = dma.vmem_to_hbm [thread:$0]  %s239, 128, %s241, [#allocation12], 64, 64, 4
    $region53: #{tpu_custom_call.1} parent=1 // pred_fallthru
      _
    // Predicated region
    $region54: #{tpu_custom_call.1} parent=1 // pred_check
      _
    $region55: #{tpu_custom_call.1} parent=1 // pred_check_branch
      %248 = sbr.rel (0) target = $region57
    $region56: #{tpu_custom_call.1} parent=1 // pred_region
      %250 = vsyncadd [#allocation12], 0
      %s251 = sshll.u32 [#allocation13], 4
      %s252 = int_to_ptr.vmem [resolvable:$true] %s251
      %s253 = sshll.u32 %s9, 4
      %s254 = int_to_ptr.hbm [resolvable:$true] %s253
      %259 = dma.vmem_to_hbm [thread:$0]  %s252, 128, %s254, [#allocation12], 64, 64, 4
    $region57: #{tpu_custom_call.1} parent=1 // pred_fallthru
      _
    // Predicated region
    $region58: #{tpu_custom_call.1} parent=1 // pred_check
      _
    $region59: #{tpu_custom_call.1} parent=1 // pred_check_branch
      %261 = sbr.rel (0) target = $region61
    $region60: #{tpu_custom_call.1} parent=1 // pred_region
      %263 = dma.done [#allocation4], 128
    $region61: #{tpu_custom_call.1} parent=1 // pred_fallthru
      _
    // Predicated region
    $region62: #{tpu_custom_call.1} parent=1 // pred_check
      _
    $region63: #{tpu_custom_call.1} parent=1 // pred_check_branch
      %265 = sbr.rel (0) target = $region65
    $region64: #{tpu_custom_call.1} parent=1 // pred_region
      %267 = dma.done [#allocation12], 128
    $region65: #{tpu_custom_call.1} parent=1 // pred_fallthru
      _
    // Predicated region
    $region66: #{tpu_custom_call.1} parent=1 // pred_check
      _
    $region67: #{tpu_custom_call.1} parent=1 // pred_check_branch
      %269 = sbr.rel (0) target = $region69
    $region68: #{tpu_custom_call.1} parent=1 // pred_region
      %271 = dma.done [#allocation12], 128
    $region69: #{tpu_custom_call.1} parent=1 // pred_fallthru
      _
    %272 = vsyncpa [#allocation3], 1
    %273 = vsyncpa [#allocation6], 1
    %274 = vsyncpa [#allocation9], 1
    %275 = vsyncpa [#allocation4], 1
    %276 = vsyncpa [#allocation12], 1

</llo_original>
